<compile_context>
chip_gen: v5e
topology: v5e:2x2
jax: 0.10.0
libtpu: 0.0.40
codegen_flags: <defaults>
</compile_context>

<pallas_src>
import jax
import jax.numpy as jnp
from jax.experimental import pallas as pl
from jax.experimental.pallas import tpu as pltpu


def actor_kernel(xt_ref, w1_ref, b1_ref, w2_ref, b2_ref, out_ref):
    # ---- fc1 + relu: (H,S) @ (S,TB) -> (H,TB), batch on the lane axis ----
    h = jnp.dot(w1_ref[...], xt_ref[...], preferred_element_type=jnp.float32)
    h = jnp.maximum(h + b1_ref[...], 0.0)            # (H,TB) + (H,1) broadcast

    # ---- fc2: (A,H) @ (H,TB) -> (A,TB) ----
    logits = jnp.dot(w2_ref[...], h.astype(w2_ref.dtype),
                     preferred_element_type=jnp.float32)
    logits = logits + b2_ref[...]                     # (A,TB) + (A,1) broadcast

    # ---- numerically stable softmax over the action (sublane) axis ----
    m = jnp.max(logits, axis=0, keepdims=True)        # (1,TB)
    e = jnp.exp(logits - m)                           # lane-dense exp
    s = jnp.sum(e, axis=0, keepdims=True)             # (1,TB)
    # Exact division (NOT approx reciprocal) so rows sum to 1 within f32 eps.
    out_ref[...] = (e / s).astype(out_ref.dtype)


def actor_forward_fm(x_t, w1, b1, w2, b2, *, tb=8192, compute_dtype=None):
    """Feature-major entry point.

    x_t: (state_size, B), w1: (H, S), b1: (H,), w2: (A, H), b2: (A,)
    (weights in PyTorch nn.Linear layout). Returns probs^T of shape (A, B).
    """
    S, B = x_t.shape
    H = w1.shape[0]
    A = w2.shape[0]

    if compute_dtype is not None:
        x_t = x_t.astype(compute_dtype)
        w1 = w1.astype(compute_dtype)
        w2 = w2.astype(compute_dtype)

    b1c = b1.reshape(H, 1).astype(jnp.float32)
    b2c = b2.reshape(A, 1).astype(jnp.float32)

    # Lane tile: multiple of 128, capped at tb, but small enough that the grid
    # has >= 2 steps when B allows (so "parallel" splits across v7x's 2 TCs).
    half = ((pl.cdiv(B, 2) + 127) // 128) * 128
    TB = max(128, min(tb, half))
    grid = (pl.cdiv(B, TB),)   # ragged last tile handled by masked writes

    itemsize = jnp.dtype(x_t.dtype).itemsize
    cost = pl.CostEstimate(
        flops=2 * B * S * H + 2 * B * H * A + 6 * B * A,
        transcendentals=B * A,
        bytes_accessed=(S * B * itemsize + H * S * itemsize + A * H * itemsize
                        + (H + A) * 4 + A * B * 4),
    )

    out_t = pl.pallas_call(
        actor_kernel,
        out_shape=jax.ShapeDtypeStruct((A, B), jnp.float32),
        grid_spec=pltpu.PrefetchScalarGridSpec(
            num_scalar_prefetch=0,
            grid=grid,
            in_specs=[
                pl.BlockSpec((S, TB), lambda i: (0, i)),   # batch-tiled on lanes
                pl.BlockSpec((H, S), lambda i: (0, 0)),    # weights resident
                pl.BlockSpec((H, 1), lambda i: (0, 0)),
                pl.BlockSpec((A, H), lambda i: (0, 0)),
                pl.BlockSpec((A, 1), lambda i: (0, 0)),
            ],
            out_specs=pl.BlockSpec((A, TB), lambda i: (0, i)),  # lane-dense store
        ),
        compiler_params=pltpu.CompilerParams(
            dimension_semantics=("parallel",),   # 2 TCs on v7x, no-op elsewhere
        ),
        cost_estimate=cost,
    )(x_t, w1, b1c, w2, b2c)

    return out_t


def actor_forward(x, w1, b1, w2, b2, *, tb=8192, compute_dtype=None):
    """PyTorch-semantics entry point: x (B, S) -> softmax probs (B, A)."""
    probs_t = actor_forward_fm(x.T, w1, b1, w2, b2,
                               tb=tb, compute_dtype=compute_dtype)
    return probs_t.T


def reference_forward(x, w1, b1, w2, b2):
    h = jnp.maximum(x @ w1.T + b1, 0.0)
    logits = h @ w2.T + b2
    return jax.nn.softmax(logits, axis=-1)


if __name__ == "__main__":
    # Shapes consistent with the module (hidden_size=128 default), batch large
    # enough to exercise a 2-step batch grid.
    batch = 256
    state_size = 16
    hidden_size = 128
    action_size = 8

    key = jax.random.PRNGKey(0)
    kx, kw1, kb1, kw2, kb2 = jax.random.split(key, 5)

    x = jax.random.normal(kx, (batch, state_size), dtype=jnp.float32)
    # Deterministic synthetic parameters, PyTorch nn.Linear layout (out, in).
    w1 = jax.random.normal(kw1, (hidden_size, state_size), dtype=jnp.float32) * 0.1
    b1 = jax.random.normal(kb1, (hidden_size,), dtype=jnp.float32) * 0.01
    w2 = jax.random.normal(kw2, (action_size, hidden_size), dtype=jnp.float32) * 0.1
    b2 = jax.random.normal(kb2, (action_size,), dtype=jnp.float32) * 0.01

    ref = reference_forward(x, w1, b1, w2, b2)

    # f32 path (strict tolerance).
    out = jax.block_until_ready(actor_forward(x, w1, b1, w2, b2))
    assert out.shape == (batch, action_size)
    assert jnp.allclose(jnp.sum(out, axis=-1), 1.0, atol=1e-5)
    assert jnp.allclose(out, ref, atol=1e-5, rtol=1e-5)

    # bf16-input path (halves input HBM bytes; looser tolerance).
    out_bf16 = jax.block_until_ready(
        actor_forward(x, w1, b1, w2, b2, compute_dtype=jnp.bfloat16))
    assert out_bf16.shape == (batch, action_size)
    assert jnp.allclose(jnp.sum(out_bf16, axis=-1), 1.0, atol=1e-3)
    assert jnp.allclose(out_bf16, ref, atol=2e-2)

    print("KERNEL_OK")
</pallas_src>

<mosaic_0001>
module attributes {stable_mosaic.version = 11 : i64} {
  func.func @actor_kernel(%arg0: i32, %arg1: memref<16x128xf32, #tpu.memory_space<vmem>>, %arg2: memref<128x16xf32, #tpu.memory_space<vmem>>, %arg3: memref<128x1xf32, #tpu.memory_space<vmem>>, %arg4: memref<8x128xf32, #tpu.memory_space<vmem>>, %arg5: memref<8x1xf32, #tpu.memory_space<vmem>>, %arg6: memref<8x128xf32, #tpu.memory_space<vmem>>) attributes {dimension_semantics = [#tpu.dimension_semantics<parallel>], iteration_bounds = array<i64: 2>, scalar_prefetch = 0 : i64, scratch_operands = 0 : i64, tpu.core_type = #tpu.core_type<tc>, window_params = [{transform_indices = @transform_0, window_bounds = array<i64: 16, 128>}, {pipeline_mode = #tpu.pipeline_mode<synchronous>, transform_indices = @transform_1, window_bounds = array<i64: 128, 16>}, {pipeline_mode = #tpu.pipeline_mode<synchronous>, transform_indices = @transform_2, window_bounds = array<i64: 128, 1>}, {pipeline_mode = #tpu.pipeline_mode<synchronous>, transform_indices = @transform_3, window_bounds = array<i64: 8, 128>}, {pipeline_mode = #tpu.pipeline_mode<synchronous>, transform_indices = @transform_4, window_bounds = array<i64: 8, 1>}, {transform_indices = @transform_5, window_bounds = array<i64: 8, 128>}]} {
    %c0 = arith.constant 0 : index
    %c0_0 = arith.constant 0 : index
    %0 = vector.load %arg2[%c0, %c0_0] : memref<128x16xf32, #tpu.memory_space<vmem>>, vector<128x16xf32>
    %c0_1 = arith.constant 0 : index
    %c0_2 = arith.constant 0 : index
    %1 = vector.load %arg1[%c0_1, %c0_2] : memref<16x128xf32, #tpu.memory_space<vmem>>, vector<16x128xf32>
    %cst = arith.constant dense<0.000000e+00> : vector<128x128xf32>
    %2 = tpu.matmul %0, %1, %cst {dimension_numbers = #tpu.dot_dimension_numbers<[1], [0], [0], [1], [0, 0, 1, 1], [], []>} : vector<128x16xf32>, vector<16x128xf32>, vector<128x128xf32> -> vector<128x128xf32>
    %c0_3 = arith.constant 0 : index
    %c0_4 = arith.constant 0 : index
    %3 = vector.load %arg3[%c0_3, %c0_4] : memref<128x1xf32, #tpu.memory_space<vmem>>, vector<128x1xf32>
    %4 = vector.broadcast %3 : vector<128x1xf32> to vector<128x128xf32>
    %5 = arith.addf %2, %4 : vector<128x128xf32>
    %cst_5 = arith.constant 0.000000e+00 : f32
    %6 = vector.broadcast %cst_5 : f32 to vector<128x128xf32>
    %7 = arith.maximumf %5, %6 : vector<128x128xf32>
    %c0_6 = arith.constant 0 : index
    %c0_7 = arith.constant 0 : index
    %8 = vector.load %arg4[%c0_6, %c0_7] : memref<8x128xf32, #tpu.memory_space<vmem>>, vector<8x128xf32>
    %cst_8 = arith.constant dense<0.000000e+00> : vector<8x128xf32>
    %9 = tpu.matmul %8, %7, %cst_8 {dimension_numbers = #tpu.dot_dimension_numbers<[1], [0], [0], [1], [0, 0, 1, 1], [], []>} : vector<8x128xf32>, vector<128x128xf32>, vector<8x128xf32> -> vector<8x128xf32>
    %c0_9 = arith.constant 0 : index
    %c0_10 = arith.constant 0 : index
    %10 = vector.load %arg5[%c0_9, %c0_10] : memref<8x1xf32, #tpu.memory_space<vmem>>, vector<8x1xf32>
    %11 = vector.broadcast %10 : vector<8x1xf32> to vector<8x128xf32>
    %12 = arith.addf %9, %11 : vector<8x128xf32>
    %cst_11 = arith.constant dense<0xFF800000> : vector<128xf32>
    %13 = vector.multi_reduction <maximumf>, %12, %cst_11 [0] : vector<8x128xf32> to vector<128xf32>
    %14 = vector.shape_cast %13 : vector<128xf32> to vector<1x128xf32>
    %15 = vector.broadcast %14 : vector<1x128xf32> to vector<8x128xf32>
    %16 = arith.subf %12, %15 : vector<8x128xf32>
    %17 = math.exp %16 : vector<8x128xf32>
    %cst_12 = arith.constant dense<0.000000e+00> : vector<128xf32>
    %18 = vector.multi_reduction <add>, %17, %cst_12 [0] : vector<8x128xf32> to vector<128xf32>
    %19 = vector.shape_cast %18 : vector<128xf32> to vector<1x128xf32>
    %20 = vector.broadcast %19 : vector<1x128xf32> to vector<8x128xf32>
    %21 = arith.divf %17, %20 : vector<8x128xf32>
    %c0_13 = arith.constant 0 : index
    %c0_14 = arith.constant 0 : index
    %22 = vector.load %arg6[%c0_13, %c0_14] : memref<8x128xf32, #tpu.memory_space<vmem>>, vector<8x128xf32>
    tpu.vector_store %arg6[%c0_13, %c0_14], %21 {strides = array<i32>} : memref<8x128xf32, #tpu.memory_space<vmem>>, vector<8x128xf32>,
    return
  }
  func.func @transform_0(%arg0: i32) -> (i32, i32) {
    %c0_i32 = arith.constant 0 : i32
    %c0_i32_0 = arith.constant 0 : i32
    return %c0_i32, %arg0 : i32, i32
  }
  func.func @transform_1(%arg0: i32) -> (i32, i32) {
    %c0_i32 = arith.constant 0 : i32
    %c0_i32_0 = arith.constant 0 : i32
    %c0_i32_1 = arith.constant 0 : i32
    return %c0_i32, %c0_i32_0 : i32, i32
  }
  func.func @transform_2(%arg0: i32) -> (i32, i32) {
    %c0_i32 = arith.constant 0 : i32
    %c0_i32_0 = arith.constant 0 : i32
    %c0_i32_1 = arith.constant 0 : i32
    return %c0_i32, %c0_i32_0 : i32, i32
  }
  func.func @transform_3(%arg0: i32) -> (i32, i32) {
    %c0_i32 = arith.constant 0 : i32
    %c0_i32_0 = arith.constant 0 : i32
    %c0_i32_1 = arith.constant 0 : i32
    return %c0_i32, %c0_i32_0 : i32, i32
  }
  func.func @transform_4(%arg0: i32) -> (i32, i32) {
    %c0_i32 = arith.constant 0 : i32
    %c0_i32_0 = arith.constant 0 : i32
    %c0_i32_1 = arith.constant 0 : i32
    return %c0_i32, %c0_i32_0 : i32, i32
  }
  func.func @transform_5(%arg0: i32) -> (i32, i32) {
    %c0_i32 = arith.constant 0 : i32
    %c0_i32_0 = arith.constant 0 : i32
    return %c0_i32, %arg0 : i32, i32
  }
}

</mosaic_0001>

<llo_original>
// kernel: tpu_custom_call.1
$region0: #{tpu_custom_call.1}
  #allocation0 [shape = 'u32[]', space=smem, size = 0x4, offset = 0x4, fixed_abs, tag = 'smem constant byte address 0x4 - core index']
  #allocation1 [shape = 'u32[72,128]{1,0:T(1,128)}', space=vmem, size = 0x9000, scoped, tag = 'internal scratch']
  %s0 = inlined_call_operand.vmem [shape: f32[16,256], index: 0, kind: input, shape index: {}]
  %s1 = inlined_call_operand.vmem [shape: f32[128,16], index: 1, kind: input, shape index: {}]
  %s2 = inlined_call_operand.vmem [shape: f32[128,1], index: 2, kind: input, shape index: {}]
  %s3 = inlined_call_operand.vmem [shape: f32[8,128], index: 3, kind: input, shape index: {}]
  %s4 = inlined_call_operand.vmem [shape: f32[8,1], index: 4, kind: input, shape index: {}]
  %s5 = inlined_call_operand.hbm [shape: f32[8,256], index: 5, kind: output, shape index: {}]
  %s6 = sld [smem:[#allocation0]]
  $region91: #{tpu_custom_call.1} parent=0
    _
  %s8 = ssub.s32 1, %s6
  %s9 = scalar_select 0, %s8, %s6
  $region1: #{tpu_custom_call.1} parent=0
    #allocation2 [shape = 'u8[16384]{0}', space=vmem, size = 0x4000, scoped, tag = 'input window, operand 0']
    #allocation3 [shape = 'u8[8192]{0}', space=vmem, size = 0x2000, scoped, tag = 'output window, operand 0']
    #allocation4 [shape = 's32[2]{0}', space=sflag, size = 0x8, scoped, tag = 'scoped memory for tpu_custom_call.1']
    %10 = vsyncpa [#allocation4], 0
    %s11 = scalar_lea.sflag [#allocation4], 1
    %12 = vsyncpa %s11, 0
    loop: start=0, step=1, limit=4
    $region2: #{tpu_custom_call.1} parent=1 // loop_pre_header
      _
    $region3: #{tpu_custom_call.1} parent=1 // loop_header
      %s14 = sphi 0, %s18
      %p15 = scmp.ge.s32.totalorder %s14, 4
      %s24 = sphi 0, %s26
      %s27 = sphi 0, %s24
      %s28 = sphi 0, %s27
      %s44 = sphi 0, %s28
      %s48 = sphi 0, %s48
      %s50 = sphi 0, %s48
      %s51 = sphi 0, %s50
      %s65 = sphi 0, %s51
      %s69 = sphi 0, %s69
      %s71 = sphi 0, %s69
      %s72 = sphi 0, %s71
      %s86 = sphi 0, %s72
      %s90 = sphi 0, %s90
      %s92 = sphi 0, %s90
      %s93 = sphi 0, %s92
      %s107 = sphi 0, %s93
      %s111 = sphi 0, %s111
      %s113 = sphi 0, %s111
      %s114 = sphi 0, %s113
      %s128 = sphi 0, %s114
      %s134 = sphi 0, %s136
      %s137 = sphi 0, %s134
      %s138 = sphi 0, %s137
      %s154 = sphi 0, %s138
    $region4: #{tpu_custom_call.1} parent=1 // loop_header_branch
      %17 = sbr.rel (%p15) target = $region8
    $region5: #{tpu_custom_call.1} parent=1 // loop_body
      %s19 = ssub.s32 %s14, 1
      %s20 = ssub.s32 %s14, 2
      %s21 = sadd.s32 %s14, 1
      %s22 = ssub.s32 %s14, %s21
      %p23 = scmp.eq.s32.totalorder %s22, 0
      %s25 = sadd.s32 %s24, 1
      %s26 = scalar_select %p23, %s24, %s25
      %p29 = pneg %p23
      %p30 = scmp.eq.s32.totalorder %s14, 1
      %p31 = por %p29, %p30
      %p32 = scmp.ne.s32.totalorder %s24, %s27
      %p33 = scmp.eq.s32.totalorder %s14, 0
      %p34 = por %p32, %p33
      %p35 = scmp.ne.s32.totalorder %s24, %s27
      %p36 = scmp.eq.s32.totalorder %s19, 1
      %p37 = por %p35, %p36
      %p38 = scmp.ne.s32.totalorder %s27, %s28
      %p39 = scmp.eq.s32.totalorder %s19, 0
      %p40 = por %p38, %p39
      %p41 = scmp.ne.s32.totalorder %s27, %s28
      %p42 = scmp.eq.s32.totalorder %s20, 1
      %p43 = por %p41, %p42
      %p45 = scmp.ne.s32.totalorder %s28, %s44
      %p46 = scmp.eq.s32.totalorder %s20, 0
      %p47 = por %p45, %p46
      %s49 = sadd.s32 %s48, 1
      %p52 = scmp.eq.s32.totalorder %s14, 1
      %p53 = scmp.ne.s32.totalorder %s48, %s50
      %p54 = scmp.eq.s32.totalorder %s14, 0
      %p55 = por %p53, %p54
      %p56 = scmp.ne.s32.totalorder %s48, %s50
      %p57 = scmp.eq.s32.totalorder %s19, 1
      %p58 = por %p56, %p57
      %p59 = scmp.ne.s32.totalorder %s50, %s51
      %p60 = scmp.eq.s32.totalorder %s19, 0
      %p61 = por %p59, %p60
      %p62 = scmp.ne.s32.totalorder %s50, %s51
      %p63 = scmp.eq.s32.totalorder %s20, 1
      %p64 = por %p62, %p63
      %p66 = scmp.ne.s32.totalorder %s51, %s65
      %p67 = scmp.eq.s32.totalorder %s20, 0
      %p68 = por %p66, %p67
      %s70 = sadd.s32 %s69, 1
      %p73 = scmp.eq.s32.totalorder %s14, 1
      %p74 = scmp.ne.s32.totalorder %s69, %s71
      %p75 = scmp.eq.s32.totalorder %s14, 0
      %p76 = por %p74, %p75
      %p77 = scmp.ne.s32.totalorder %s69, %s71
      %p78 = scmp.eq.s32.totalorder %s19, 1
      %p79 = por %p77, %p78
      %p80 = scmp.ne.s32.totalorder %s71, %s72
      %p81 = scmp.eq.s32.totalorder %s19, 0
      %p82 = por %p80, %p81
      %p83 = scmp.ne.s32.totalorder %s71, %s72
      %p84 = scmp.eq.s32.totalorder %s20, 1
      %p85 = por %p83, %p84
      %p87 = scmp.ne.s32.totalorder %s72, %s86
      %p88 = scmp.eq.s32.totalorder %s20, 0
      %p89 = por %p87, %p88
      %s91 = sadd.s32 %s90, 1
      %p94 = scmp.eq.s32.totalorder %s14, 1
      %p95 = scmp.ne.s32.totalorder %s90, %s92
      %p96 = scmp.eq.s32.totalorder %s14, 0
      %p97 = por %p95, %p96
      %p98 = scmp.ne.s32.totalorder %s90, %s92
      %p99 = scmp.eq.s32.totalorder %s19, 1
      %p100 = por %p98, %p99
      %p101 = scmp.ne.s32.totalorder %s92, %s93
      %p102 = scmp.eq.s32.totalorder %s19, 0
      %p103 = por %p101, %p102
      %p104 = scmp.ne.s32.totalorder %s92, %s93
      %p105 = scmp.eq.s32.totalorder %s20, 1
      %p106 = por %p104, %p105
      %p108 = scmp.ne.s32.totalorder %s93, %s107
      %p109 = scmp.eq.s32.totalorder %s20, 0
      %p110 = por %p108, %p109
      %s112 = sadd.s32 %s111, 1
      %p115 = scmp.eq.s32.totalorder %s14, 1
      %p116 = scmp.ne.s32.totalorder %s111, %s113
      %p117 = scmp.eq.s32.totalorder %s14, 0
      %p118 = por %p116, %p117
      %p119 = scmp.ne.s32.totalorder %s111, %s113
      %p120 = scmp.eq.s32.totalorder %s19, 1
      %p121 = por %p119, %p120
      %p122 = scmp.ne.s32.totalorder %s113, %s114
      %p123 = scmp.eq.s32.totalorder %s19, 0
      %p124 = por %p122, %p123
      %p125 = scmp.ne.s32.totalorder %s113, %s114
      %p126 = scmp.eq.s32.totalorder %s20, 1
      %p127 = por %p125, %p126
      %p129 = scmp.ne.s32.totalorder %s114, %s128
      %p130 = scmp.eq.s32.totalorder %s20, 0
      %p131 = por %p129, %p130
      %s132 = ssub.s32 %s14, %s21
      %p133 = scmp.eq.s32.totalorder %s132, 0
      %s135 = sadd.s32 %s134, 1
      %s136 = scalar_select %p133, %s134, %s135
      %p139 = pneg %p133
      %p140 = scmp.eq.s32.totalorder %s14, 1
      %p141 = por %p139, %p140
      %p142 = scmp.ne.s32.totalorder %s134, %s137
      %p143 = scmp.eq.s32.totalorder %s14, 0
      %p144 = por %p142, %p143
      %p145 = scmp.ne.s32.totalorder %s134, %s137
      %p146 = scmp.eq.s32.totalorder %s19, 1
      %p147 = por %p145, %p146
      %p148 = scmp.ne.s32.totalorder %s137, %s138
      %p149 = scmp.eq.s32.totalorder %s19, 0
      %p150 = por %p148, %p149
      %p151 = scmp.ne.s32.totalorder %s137, %s138
      %p152 = scmp.eq.s32.totalorder %s20, 1
      %p153 = por %p151, %p152
      %p155 = scmp.ne.s32.totalorder %s138, %s154
      %p156 = scmp.eq.s32.totalorder %s20, 0
      %p157 = por %p155, %p156
      %p158 = scmp.le.s32.totalorder 1, %s14
      %p159 = scmp.lt.s32.totalorder %s14, 3
      %p160 = pnand %p158, %p159
      %p161 = pneg %p160
      // Predicated region
      $region9: #{tpu_custom_call.1} parent=5 // pred_check
        _
      $region10: #{tpu_custom_call.1} parent=5 // pred_check_branch
        %163 = sbr.rel (%p160) target = $region12
      $region11: #{tpu_custom_call.1} parent=5 // pred_region
        %s164 = ssub.s32 %s14, 1
        // Predicated region
        $region13: #{tpu_custom_call.1} parent=11 // pred_check
          %p165 = pneg %p61
        $region14: #{tpu_custom_call.1} parent=11 // pred_check_branch
          %167 = sbr.rel (%p165) target = $region16
        $region15: #{tpu_custom_call.1} parent=11 // pred_region
          _
        $region16: #{tpu_custom_call.1} parent=11 // pred_fallthru
          _
        // Predicated region
        $region17: #{tpu_custom_call.1} parent=11 // pred_check
          %p168 = pneg %p82
        $region18: #{tpu_custom_call.1} parent=11 // pred_check_branch
          %170 = sbr.rel (%p168) target = $region20
        $region19: #{tpu_custom_call.1} parent=11 // pred_region
          _
        $region20: #{tpu_custom_call.1} parent=11 // pred_fallthru
          _
        // Predicated region
        $region21: #{tpu_custom_call.1} parent=11 // pred_check
          %p171 = pneg %p103
        $region22: #{tpu_custom_call.1} parent=11 // pred_check_branch
          %173 = sbr.rel (%p171) target = $region24
        $region23: #{tpu_custom_call.1} parent=11 // pred_region
          _
        $region24: #{tpu_custom_call.1} parent=11 // pred_fallthru
          _
        // Predicated region
        $region25: #{tpu_custom_call.1} parent=11 // pred_check
          %p174 = pneg %p124
        $region26: #{tpu_custom_call.1} parent=11 // pred_check_branch
          %176 = sbr.rel (%p174) target = $region28
        $region27: #{tpu_custom_call.1} parent=11 // pred_region
          _
        $region28: #{tpu_custom_call.1} parent=11 // pred_fallthru
          _
      $region12: #{tpu_custom_call.1} parent=5 // pred_fallthru
        _
      %p177 = scmp.lt.s32.totalorder %s14, 2
      // Predicated region
      $region29: #{tpu_custom_call.1} parent=5 // pred_check
        %p178 = pneg %p177
      $region30: #{tpu_custom_call.1} parent=5 // pred_check_branch
        %180 = sbr.rel (%p178) target = $region32
      $region31: #{tpu_custom_call.1} parent=5 // pred_region
        // Predicated region
        $region33: #{tpu_custom_call.1} parent=31 // pred_check
          %p181 = pneg %p34
        $region34: #{tpu_custom_call.1} parent=31 // pred_check_branch
          %183 = sbr.rel (%p181) target = $region36
        $region35: #{tpu_custom_call.1} parent=31 // pred_region
          %s184 = sand.u32 %s24, 1
          %s185 = sand.u32 %s24, 1
          %s186 = smul.addr %s185, 16
          %s187 = scalar_lea.vmem [#allocation2], %s186
          %s188 = smul.addr %s14, 8
          %s189 = scalar_lea.vmem %s0, %s188
          // Predicated region
          $region37: #{tpu_custom_call.1} parent=35 // pred_check
            _
          $region38: #{tpu_custom_call.1} parent=35 // pred_check_branch
            %191 = sbr.rel (0) target = $region40
          $region39: #{tpu_custom_call.1} parent=35 // pred_region
            // Predicated region
            $region41: #{tpu_custom_call.1} parent=39 // pred_check
              _
            $region42: #{tpu_custom_call.1} parent=39 // pred_check_branch
              %193 = sbr.rel (0) target = $region44
            $region43: #{tpu_custom_call.1} parent=39 // pred_region
              // Predicated region
              $region56: #{tpu_custom_call.1} parent=43 // pred_check
                _
              $region57: #{tpu_custom_call.1} parent=43 // pred_check_branch
                %211 = sbr.rel (0) target = $region59
              $region58: #{tpu_custom_call.1} parent=43 // pred_region
                loop: start=0, step=1, limit=1
                $region60: #{tpu_custom_call.1} parent=58 // loop_pre_header
                  _
                $region61: #{tpu_custom_call.1} parent=58 // loop_header
                  %s213 = sphi 0, %s217
                  %p214 = scmp.ge.s32.totalorder %s213, 1
                  %s218 = sphi %s189, %s189
                  %s219 = sphi %s187, %s187
                $region62: #{tpu_custom_call.1} parent=58 // loop_header_branch
                  %216 = sbr.rel (%p214) target = $region66
                $region63: #{tpu_custom_call.1} parent=58 // loop_body
                  %v220 = vld [vmem:[%s218] sm:$0xff]
                  %221 = vst [vmem:[%s219] sm:$0xff] %v220
                  %v222 = vld [vmem:[%s218 + $0x10] sm:$0xff]
                  %223 = vst [vmem:[%s219 + $0x8] sm:$0xff] %v222
                $region64: #{tpu_custom_call.1} parent=58 // loop_footer
                  %s217 = sadd.s32 1, %s213
                $region65: #{tpu_custom_call.1} parent=58 // loop_footer_branch
                  %212 = sbr.rel target = $region61
                $region66: #{tpu_custom_call.1} parent=58 // loop_exit
                  _
              $region59: #{tpu_custom_call.1} parent=43 // pred_fallthru
                _
              // Predicated region
              $region67: #{tpu_custom_call.1} parent=43 // pred_check
                _
              $region68: #{tpu_custom_call.1} parent=43 // pred_check_branch
                %225 = sbr.rel target = $region70
              $region69: #{tpu_custom_call.1} parent=43 // pred_region
                _
              $region70: #{tpu_custom_call.1} parent=43 // pred_fallthru
                _
            $region44: #{tpu_custom_call.1} parent=39 // pred_fallthru
              _
            // Predicated region
            $region45: #{tpu_custom_call.1} parent=39 // pred_check
              _
            $region46: #{tpu_custom_call.1} parent=39 // pred_check_branch
              %195 = sbr.rel target = $region48
            $region47: #{tpu_custom_call.1} parent=39 // pred_region
              %s197 = ssub.s32 256, 1
              loop: start=0, step=1, limit=1
              $region49: #{tpu_custom_call.1} parent=47 // loop_pre_header
                _
              $region50: #{tpu_custom_call.1} parent=47 // loop_header
                %s199 = sphi 0, %s203
                %p200 = scmp.ge.s32.totalorder %s199, 1
                %s204 = sphi %s189, %s189
                %s205 = sphi %s187, %s187
              $region51: #{tpu_custom_call.1} parent=47 // loop_header_branch
                %202 = sbr.rel (%p200) target = $region55
              $region52: #{tpu_custom_call.1} parent=47 // loop_body
                %v206 = vld [vmem:[%s204] sm:%s197]
                %207 = vst [vmem:[%s205] sm:%s197] %v206
                %v208 = vld [vmem:[%s204 + $0x10] sm:%s197]
                %209 = vst [vmem:[%s205 + $0x8] sm:%s197] %v208
              $region53: #{tpu_custom_call.1} parent=47 // loop_footer
                %s203 = sadd.s32 1, %s199
              $region54: #{tpu_custom_call.1} parent=47 // loop_footer_branch
                %198 = sbr.rel target = $region50
              $region55: #{tpu_custom_call.1} parent=47 // loop_exit
                _
            $region48: #{tpu_custom_call.1} parent=39 // pred_fallthru
              _
          $region40: #{tpu_custom_call.1} parent=35 // pred_fallthru
            _
          %226 = vnop
        $region36: #{tpu_custom_call.1} parent=31 // pred_fallthru
          _
      $region32: #{tpu_custom_call.1} parent=5 // pred_fallthru
        _
      %p227 = scmp.le.s32.totalorder 1, %s14
      %p228 = scmp.lt.s32.totalorder %s14, 3
      %p229 = pnand %p227, %p228
      %p230 = pneg %p229
      // Predicated region
      $region71: #{tpu_custom_call.1} parent=5 // pred_check
        _
      $region72: #{tpu_custom_call.1} parent=5 // pred_check_branch
        %232 = sbr.rel (%p229) target = $region74
      $region73: #{tpu_custom_call.1} parent=5 // pred_region
        %s233 = ssub.s32 %s14, 1
        %s234 = sand.u32 %s27, 1
        %s235 = sand.u32 %s27, 1
        %s236 = smul.addr %s235, 16
        %s237 = scalar_lea.vmem [#allocation2], %s236
        // Predicated region
        $region75: #{tpu_custom_call.1} parent=73 // pred_check
          %p238 = pneg %p40
        $region76: #{tpu_custom_call.1} parent=73 // pred_check_branch
          %240 = sbr.rel (%p238) target = $region78
        $region77: #{tpu_custom_call.1} parent=73 // pred_region
          _
        $region78: #{tpu_custom_call.1} parent=73 // pred_fallthru
          _
        %s241 = sand.u32 %s27, 1
        %s242 = sand.u32 %s27, 1
        %s243 = smul.addr %s242, 16
        %s244 = scalar_lea.vmem [#allocation2], %s243
        %p245 = pneg %p40
        %p246 = pneg %p37
        %p247 = pneg %p61
        %p248 = pneg %p58
        %p249 = pneg %p82
        %p250 = pneg %p79
        %p251 = pneg %p103
        %p252 = pneg %p100
        %p253 = pneg %p124
        %p254 = pneg %p121
        %p255 = pneg %p150
        %p256 = pneg %p147
        %s257 = sand.u32 %s137, 1
        %s258 = scalar_lea.sflag [#allocation4], %s257
        %s259 = sand.u32 %s137, 1
        %s260 = smul.addr %s259, 8
        %s261 = scalar_lea.vmem [#allocation3], %s260
        %v262 = vld [vmem:[%s1] sm:$0xff]
        %v263 = vld [vmem:[%s1 + $0x8] sm:$0xff]
        %v264 = vld [vmem:[%s1 + $0x10] sm:$0xff]
        %v265 = vld [vmem:[%s1 + $0x18] sm:$0xff]
        %v266 = vld [vmem:[%s1 + $0x20] sm:$0xff]
        %v267 = vld [vmem:[%s1 + $0x28] sm:$0xff]
        %v268 = vld [vmem:[%s1 + $0x30] sm:$0xff]
        %v269 = vld [vmem:[%s1 + $0x38] sm:$0xff]
        %v270 = vld [vmem:[%s1 + $0x40] sm:$0xff]
        %v271 = vld [vmem:[%s1 + $0x48] sm:$0xff]
        %v272 = vld [vmem:[%s1 + $0x50] sm:$0xff]
        %v273 = vld [vmem:[%s1 + $0x58] sm:$0xff]
        %v274 = vld [vmem:[%s1 + $0x60] sm:$0xff]
        %v275 = vld [vmem:[%s1 + $0x68] sm:$0xff]
        %v276 = vld [vmem:[%s1 + $0x70] sm:$0xff]
        %v277 = vld [vmem:[%s1 + $0x78] sm:$0xff]
        %v278 = vld [vmem:[%s237] sm:$0xff]
        %v279 = vld [vmem:[%s237 + $0x8] sm:$0xff]
        %v280 = vld [vmem:[%s2] sm:$0xff]
        %v281 = vld [vmem:[%s2 + $0x8] sm:$0xff]
        %v282 = vld [vmem:[%s2 + $0x10] sm:$0xff]
        %v283 = vld [vmem:[%s2 + $0x18] sm:$0xff]
        %v284 = vld [vmem:[%s2 + $0x20] sm:$0xff]
        %v285 = vld [vmem:[%s2 + $0x28] sm:$0xff]
        %v286 = vld [vmem:[%s2 + $0x30] sm:$0xff]
        %v287 = vld [vmem:[%s2 + $0x38] sm:$0xff]
        %v288 = vld [vmem:[%s2 + $0x40] sm:$0xff]
        %v289 = vld [vmem:[%s2 + $0x48] sm:$0xff]
        %v290 = vld [vmem:[%s2 + $0x50] sm:$0xff]
        %v291 = vld [vmem:[%s2 + $0x58] sm:$0xff]
        %v292 = vld [vmem:[%s2 + $0x60] sm:$0xff]
        %v293 = vld [vmem:[%s2 + $0x68] sm:$0xff]
        %v294 = vld [vmem:[%s2 + $0x70] sm:$0xff]
        %v295 = vld [vmem:[%s2 + $0x78] sm:$0xff]
        %297 = vset.pattern.permute.xlu0 0
        %298 = vperm.xlu0 %297, %v280
        %v299 = vpop.permute.xlu0 %298
        %302 = vset.pattern.permute.xlu0 0
        %303 = vperm.xlu0 %302, %v281
        %v304 = vpop.permute.xlu0 %303
        %307 = vset.pattern.permute.xlu0 0
        %308 = vperm.xlu0 %307, %v282
        %v309 = vpop.permute.xlu0 %308
        %312 = vset.pattern.permute.xlu0 0
        %313 = vperm.xlu0 %312, %v283
        %v314 = vpop.permute.xlu0 %313
        %317 = vset.pattern.permute.xlu0 0
        %318 = vperm.xlu0 %317, %v284
        %v319 = vpop.permute.xlu0 %318
        %322 = vset.pattern.permute.xlu0 0
        %323 = vperm.xlu0 %322, %v285
        %v324 = vpop.permute.xlu0 %323
        %327 = vset.pattern.permute.xlu0 0
        %328 = vperm.xlu0 %327, %v286
        %v329 = vpop.permute.xlu0 %328
        %332 = vset.pattern.permute.xlu0 0
        %333 = vperm.xlu0 %332, %v287
        %v334 = vpop.permute.xlu0 %333
        %337 = vset.pattern.permute.xlu0 0
        %338 = vperm.xlu0 %337, %v288
        %v339 = vpop.permute.xlu0 %338
        %342 = vset.pattern.permute.xlu0 0
        %343 = vperm.xlu0 %342, %v289
        %v344 = vpop.permute.xlu0 %343
        %347 = vset.pattern.permute.xlu0 0
        %348 = vperm.xlu0 %347, %v290
        %v349 = vpop.permute.xlu0 %348
        %352 = vset.pattern.permute.xlu0 0
        %353 = vperm.xlu0 %352, %v291
        %v354 = vpop.permute.xlu0 %353
        %357 = vset.pattern.permute.xlu0 0
        %358 = vperm.xlu0 %357, %v292
        %v359 = vpop.permute.xlu0 %358
        %362 = vset.pattern.permute.xlu0 0
        %363 = vperm.xlu0 %362, %v293
        %v364 = vpop.permute.xlu0 %363
        %367 = vset.pattern.permute.xlu0 0
        %368 = vperm.xlu0 %367, %v294
        %v369 = vpop.permute.xlu0 %368
        %372 = vset.pattern.permute.xlu0 0
        %373 = vperm.xlu0 %372, %v295
        %v374 = vpop.permute.xlu0 %373
        %vm376 = vcmask 130048
        %v378 = vsel %vm376, %v262, 0
        %v381 = vsel %vm376, %v263, 0
        %v384 = vsel %vm376, %v264, 0
        %v387 = vsel %vm376, %v265, 0
        %v390 = vsel %vm376, %v266, 0
        %v393 = vsel %vm376, %v267, 0
        %v396 = vsel %vm376, %v268, 0
        %v399 = vsel %vm376, %v269, 0
        %v402 = vsel %vm376, %v270, 0
        %v405 = vsel %vm376, %v271, 0
        %v408 = vsel %vm376, %v272, 0
        %v411 = vsel %vm376, %v273, 0
        %v414 = vsel %vm376, %v274, 0
        %v417 = vsel %vm376, %v275, 0
        %v420 = vsel %vm376, %v276, 0
        %v423 = vsel %vm376, %v277, 0
        %425 = vmatpush.msra.mxu0 0.0
        %426 = vmatpush.msra.mxu0 0.0
        %427 = vmatpush.msra.mxu0 0.0
        %428 = vmatpush.msra.mxu0 0.0
        %429 = vmatpush.msra.mxu0 0.0
        %430 = vmatpush.msra.mxu0 0.0
        %431 = vmatpush.msra.mxu0 0.0
        %432 = vmatpush.msra.mxu0 0.0
        %433 = vmatpush.msra.mxu0 0.0
        %434 = vmatpush.msra.mxu0 0.0
        %435 = vmatpush.msra.mxu0 0.0
        %436 = vmatpush.msra.mxu0 0.0
        %437 = vmatpush.msra.mxu0 0.0
        %438 = vmatpush.msra.mxu0 0.0
        %439 = vmatpush.msra.mxu0 %v279
        %440 = vmatpush.msra.mxu0 %v278
        %441 = vmatmul.f32.gmra.mxu0 %v378
        %v442 = vpop.f32.mrf.mxu0
        %v443 = vadd.f32 %v299, %v442
        %444 = vmatmul.f32.gmra.mxu0 %v381
        %v445 = vpop.f32.mrf.mxu0
        %v446 = vadd.f32 %v304, %v445
        %447 = vmatmul.f32.gmra.mxu0 %v384
        %v448 = vpop.f32.mrf.mxu0
        %v449 = vadd.f32 %v309, %v448
        %450 = vmatmul.f32.gmra.mxu0 %v387
        %v451 = vpop.f32.mrf.mxu0
        %v452 = vadd.f32 %v314, %v451
        %453 = vmatmul.f32.gmra.mxu0 %v390
        %v454 = vpop.f32.mrf.mxu0
        %v455 = vadd.f32 %v319, %v454
        %456 = vmatmul.f32.gmra.mxu0 %v393
        %v457 = vpop.f32.mrf.mxu0
        %v458 = vadd.f32 %v324, %v457
        %459 = vmatmul.f32.gmra.mxu0 %v396
        %v460 = vpop.f32.mrf.mxu0
        %v461 = vadd.f32 %v329, %v460
        %462 = vmatmul.f32.gmra.mxu0 %v399
        %v463 = vpop.f32.mrf.mxu0
        %v464 = vadd.f32 %v334, %v463
        %465 = vmatmul.f32.gmra.mxu0 %v402
        %v466 = vpop.f32.mrf.mxu0
        %v467 = vadd.f32 %v339, %v466
        %468 = vmatmul.f32.gmra.mxu0 %v405
        %v469 = vpop.f32.mrf.mxu0
        %v470 = vadd.f32 %v344, %v469
        %471 = vmatmul.f32.gmra.mxu0 %v408
        %v472 = vpop.f32.mrf.mxu0
        %v473 = vadd.f32 %v349, %v472
        %474 = vmatmul.f32.gmra.mxu0 %v411
        %v475 = vpop.f32.mrf.mxu0
        %v476 = vadd.f32 %v354, %v475
        %477 = vmatmul.f32.gmra.mxu0 %v414
        %v478 = vpop.f32.mrf.mxu0
        %v479 = vadd.f32 %v359, %v478
        %480 = vmatmul.f32.gmra.mxu0 %v417
        %v481 = vpop.f32.mrf.mxu0
        %v482 = vadd.f32 %v364, %v481
        %483 = vmatmul.f32.gmra.mxu0 %v420
        %v484 = vpop.f32.mrf.mxu0
        %v485 = vadd.f32 %v369, %v484
        %486 = vmatmul.f32.gmra.mxu0 %v423
        %v487 = vpop.f32.mrf.mxu0
        %v488 = vadd.f32 %v374, %v487
        %489 = vdwg.mxu0
        %v490 = vmax.f32 %v443, 0.0
        %v491 = vmax.f32 %v446, 0.0
        %v492 = vmax.f32 %v449, 0.0
        %v493 = vmax.f32 %v452, 0.0
        %v494 = vmax.f32 %v455, 0.0
        %v495 = vmax.f32 %v458, 0.0
        %v496 = vmax.f32 %v461, 0.0
        %v497 = vmax.f32 %v464, 0.0
        %v498 = vmax.f32 %v467, 0.0
        %v499 = vmax.f32 %v470, 0.0
        %v500 = vmax.f32 %v473, 0.0
        %v501 = vmax.f32 %v476, 0.0
        %v502 = vmax.f32 %v479, 0.0
        %v503 = vmax.f32 %v482, 0.0
        %v504 = vmax.f32 %v485, 0.0
        %v505 = vmax.f32 %v488, 0.0
        %v506 = vld [vmem:[%s3] sm:$0xff]
        %v507 = vld [vmem:[%s4] sm:$0xff]
        %509 = vset.pattern.permute.xlu0 0
        %510 = vperm.xlu0 %509, %v507
        %v511 = vpop.permute.xlu0 %510
        %513 = vmatpush.msra.mxu0 %v505
        %514 = vmatpush.msra.mxu0 %v504
        %515 = vmatpush.msra.mxu0 %v503
        %516 = vmatpush.msra.mxu0 %v502
        %517 = vmatpush.msra.mxu0 %v501
        %518 = vmatpush.msra.mxu0 %v500
        %519 = vmatpush.msra.mxu0 %v499
        %520 = vmatpush.msra.mxu0 %v498
        %521 = vmatpush.msra.mxu0 %v497
        %522 = vmatpush.msra.mxu0 %v496
        %523 = vmatpush.msra.mxu0 %v495
        %524 = vmatpush.msra.mxu0 %v494
        %525 = vmatpush.msra.mxu0 %v493
        %526 = vmatpush.msra.mxu0 %v492
        %527 = vmatpush.msra.mxu0 %v491
        %528 = vmatpush.msra.mxu0 %v490
        %529 = vmatmul.f32.gmra.mxu0 %v506
        %v530 = vpop.f32.mrf.mxu0
        %v531 = vadd.f32 %v511, %v530
        %532 = vdwg.mxu0
        %v533 = vrot.slane %v531, 4
        %v534 = vmax.f32 %v531, %v533
        %v535 = vrot.slane %v534, 2
        %v536 = vmax.f32 %v534, %v535
        %v537 = vrot.slane %v536, 1
        %v538 = vmax.f32 %v536, %v537
        %v539 = vsub.f32 %v531, %v538
        %v540 = vmul.f32 %v539, 1.442695
        %v541 = vpow.pop %v540
        %v542 = vrot.slane %v541, 4
        %v543 = vadd.f32 %v541, %v542
        %v544 = vrot.slane %v543, 2
        %v545 = vadd.f32 %v543, %v544
        %v546 = vrot.slane %v545, 1
        %v547 = vadd.f32 %v545, %v546
        %v548 = vrcp.pop %v547
        %v549 = vmul.f32 %v547, %v548
        %v550 = vsub.f32 1.0, %v549
        %v551 = vmul.f32 %v548, %v550
        %v552 = vadd.f32 %v548, %v551
        %vm553 = vweird.f32 %v547
        %vm554 = vweird.f32 %v548
        %vm555 = vmor %vm553, %vm554
        %v556 = vsel %vm555, %v548, %v552
        %v557 = vand.u32 2147483647, %v547
        %vm558 = vcmp.eq.f32.partialorder %v557, 8.507059e+37
        %v559 = vand.u32 %v547, 2147483648
        %v560 = vor.u32 1.1754944e-38, %v559
        %v561 = vsel %vm558, %v560, %v556
        %v562 = vmul.f32 %v541, %v561
        %563 = vst [vmem:[%s261] sm:$0xff] %v562
        %s564 = sand.u32 %s137, 1
        %s565 = scalar_lea.sflag [#allocation4], %s564
        %s566 = sand.u32 %s137, 1
        %s567 = smul.addr %s566, 8
        %s568 = scalar_lea.vmem [#allocation3], %s567
        // Predicated region
        $region79: #{tpu_custom_call.1} parent=73 // pred_check
          %p569 = pneg %p147
        $region80: #{tpu_custom_call.1} parent=73 // pred_check_branch
          %571 = sbr.rel (%p569) target = $region82
        $region81: #{tpu_custom_call.1} parent=73 // pred_region
          %573 = vsyncadd %s565, 0
          %s574 = smul.addr %s19, 8
          %s575 = scalar_lea.hbm %s5, %s574
          %s577 = sshll.u32 %s568, 4
          %s578 = int_to_ptr.vmem [resolvable:$true] %s577
          %s579 = sshll.u32 %s575, 4
          %s580 = int_to_ptr.hbm [resolvable:$true] %s579
          %582 = dma.vmem_to_hbm [thread:$0]  %s578, 128, %s580, %s565
        $region82: #{tpu_custom_call.1} parent=73 // pred_fallthru
          _
      $region74: #{tpu_custom_call.1} parent=5 // pred_fallthru
        _
      %p583 = scmp.le.s32.totalorder 2, %s14
      // Predicated region
      $region83: #{tpu_custom_call.1} parent=5 // pred_check
        %p584 = pneg %p583
      $region84: #{tpu_custom_call.1} parent=5 // pred_check_branch
        %586 = sbr.rel (%p584) target = $region86
      $region85: #{tpu_custom_call.1} parent=5 // pred_region
        %s587 = ssub.s32 %s14, 2
        // Predicated region
        $region87: #{tpu_custom_call.1} parent=85 // pred_check
          %p588 = pneg %p153
        $region88: #{tpu_custom_call.1} parent=85 // pred_check_branch
          %590 = sbr.rel (%p588) target = $region90
        $region89: #{tpu_custom_call.1} parent=85 // pred_region
          %s591 = sand.u32 %s138, 1
          %s592 = scalar_lea.sflag [#allocation4], %s591
          %s593 = sand.u32 %s138, 1
          %s594 = smul.addr %s593, 8
          %s595 = scalar_lea.vmem [#allocation3], %s594
          %597 = dma.done %s592, 128
        $region90: #{tpu_custom_call.1} parent=85 // pred_fallthru
          _
      $region86: #{tpu_custom_call.1} parent=5 // pred_fallthru
        _
    $region6: #{tpu_custom_call.1} parent=1 // loop_footer
      %s18 = sadd.s32 1, %s14
    $region7: #{tpu_custom_call.1} parent=1 // loop_footer_branch
      %13 = sbr.rel target = $region3
    $region8: #{tpu_custom_call.1} parent=1 // loop_exit
      _
    %598 = vsyncpa [#allocation4], 1
    %s599 = scalar_lea.sflag [#allocation4], 1
    %600 = vsyncpa %s599, 1

</llo_original>
